<compile_context>
chip_gen: v6e
topology: v6e:2x2x1
jax: 0.10.0
libtpu: 0.0.40
codegen_flags: <defaults>
</compile_context>

<pallas_src>
import jax
import jax.numpy as jnp
import numpy as np
from jax.experimental import pallas as pl
from jax.experimental.pallas import tpu as pltpu

# ---------------------------------------------------------------------------
# Model hyper-parameters (small, consistent with the module constructor).
# ---------------------------------------------------------------------------
B = 2                   # batch (number of news items)
T = 16                  # title_word_size
WORD_DIM = 32           # word_dim
ENTITY_DIM = 24         # entity_dim
ENTITY_CATE = 8         # entity_cate_size
WINDOWS = (1, 2, 3, 4, 5)
N_FILTERS = 32          # 5 windows * 32 filters = 160 = LayerNorm width
OUT_DIM = len(WINDOWS) * N_FILTERS          # 160
MAX_W = WINDOWS[-1]                         # 5 taps in the stacked weights
LN_EPS = 1e-5

BT = B * T                                  # 32 rows (matmul M dim)
SLAB_DIM = 3 * WORD_DIM                     # 96 = word | ent | cate channels
EC_IN = ENTITY_DIM + ENTITY_CATE            # 32
EC_OUT = 2 * WORD_DIM                       # 64

# Packed-parameter layout (one 2D array, 160 lanes wide, 8-row-aligned blocks).
TAP_STRIDE = 128                            # per-tap K slice padded to 128
K_IM2COL = MAX_W * TAP_STRIDE               # 640
VEC_ROW = K_IM2COL                          # rows 640..647: b_ec|conv_b|gamma|beta
WEC_ROW = VEC_ROW + 8                       # rows 648..679: block-diag ent/cate proj
MASK_ROW = WEC_ROW + 40                     # rows 688..719: static validity mask
PACK_ROWS = MASK_ROW + BT                   # 720 rows total (~450 KB f32)


# ---------------------------------------------------------------------------
# Pallas kernel: whole batch, single invocation (no grid).
# ---------------------------------------------------------------------------
def _new_encoder_kernel(data_ref, par_ref, out_ref, im2col_ref):
    f32 = jnp.float32

    # Zero the im2col scratch once (persistent scratch is uninitialized).
    # The zero tail rows of each tap block implement the zero padding of the
    # shifted windows; the unused lanes 96:128 per tap stay zero as well.
    im2col_ref[...] = jnp.zeros((BT, K_IM2COL), f32)

    # Small packed vector params: one aligned (8, 160) load, sliced in regs.
    vec = par_ref[VEC_ROW:VEC_ROW + 8, :]
    b_ec = vec[0:1, :EC_OUT]                       # (1, 64)  [be | bc]
    conv_b = vec[1:2, :]                           # (1, 160)
    gamma = vec[2:3, :]                            # (1, 160)
    beta = vec[3:4, :]                             # (1, 160)

    # Fused entity + category projection (block-diagonal weight, one tanh).
    entcat = data_ref[:, WORD_DIM:]                                    # (BT, 32)
    w_ec = par_ref[WEC_ROW:WEC_ROW + EC_IN, :EC_OUT]                   # (32, 64)
    proj = jnp.tanh(
        jnp.dot(entcat, w_ec, preferred_element_type=f32) + b_ec)      # (BT, 64)

    # Scatter the tap-shifted [word | ent | cate] windows into the im2col
    # scratch.  Tap dw occupies lanes [dw*128, dw*128+96); rows BT-dw..BT-1
    # stay zero (window runs off the end of the flattened batch).
    for dw in range(MAX_W):
        rows = BT - dw
        c0 = dw * TAP_STRIDE
        im2col_ref[0:rows, c0:c0 + WORD_DIM] = data_ref[dw:BT, 0:WORD_DIM]
        im2col_ref[0:rows, c0 + WORD_DIM:c0 + SLAB_DIM] = proj[dw:BT, :]

    # One fused conv matmul for all 5 window sizes: (BT, 640) x (640, 160).
    conv = jnp.dot(im2col_ref[...], par_ref[0:K_IM2COL, :],
                   preferred_element_type=f32) + conv_b
    conv = jnp.maximum(conv, 0.0)                                      # ReLU

    # Static validity mask (precomputed host-side): zeroes positions
    # t >= T - w + 1, which also kills cross-item / zero-pad contamination
    # from the shared tap shift.  Since ReLU >= 0 and every window has at
    # least one valid position, zeroing == max-pool over valid positions.
    conv = conv * par_ref[MASK_ROW:MASK_ROW + BT, :]

    # Max-pool over title positions, per news item.
    pooled = jnp.max(conv.reshape(B, T, OUT_DIM), axis=1)              # (B, 160)

    # TODO(synk): F.dropout(p=0.2) is identity in eval mode; training-mode
    # dropout would need pltpu.prng_* and cannot match torch's RNG anyway.

    # LayerNorm(160) (biased variance, matching nn.LayerNorm).
    mean = jnp.mean(pooled, axis=-1, keepdims=True)
    var = jnp.mean((pooled - mean) ** 2, axis=-1, keepdims=True)
    out_ref[...] = (pooled - mean) * jax.lax.rsqrt(var + LN_EPS) * gamma + beta


# ---------------------------------------------------------------------------
# Host-side parameter packing: pure NumPy, run ONCE at init and cached.
# ---------------------------------------------------------------------------
def pack_params(params):
    p = {k: np.asarray(v, np.float32) for k, v in params.items()}
    packed = np.zeros((PACK_ROWS, OUT_DIM), np.float32)

    # rows 0:640 -- fused conv weights, one 128-row block per tap dw:
    #   packed[dw*128 + ch*32 + d, wi*32 + f] = conv_w{wi+1}[ch, dw, d, f]
    #   (zero when dw >= w, i.e. the tap does not exist for that window).
    for wi, w in enumerate(WINDOWS):
        cw = p[f"conv_w{w}"]                          # (3, w, 32, 32)
        for dw in range(w):
            for ch in range(3):
                r0 = dw * TAP_STRIDE + ch * WORD_DIM
                packed[r0:r0 + WORD_DIM,
                       wi * N_FILTERS:(wi + 1) * N_FILTERS] = cw[ch, dw]

    # rows 640:648 -- vector params: [be|bc], conv bias, gamma, beta.
    packed[VEC_ROW + 0, :WORD_DIM] = p["be"][0]
    packed[VEC_ROW + 0, WORD_DIM:EC_OUT] = p["bc"][0]
    packed[VEC_ROW + 1] = np.concatenate([p[f"conv_b{w}"][0] for w in WINDOWS])
    packed[VEC_ROW + 2] = p["gamma"][0]
    packed[VEC_ROW + 3] = p["beta"][0]

    # rows 648:680 -- block-diagonal entity/category projection (32 -> 64).
    packed[WEC_ROW:WEC_ROW + ENTITY_DIM, :WORD_DIM] = p["We"]
    packed[WEC_ROW + ENTITY_DIM:WEC_ROW + EC_IN, WORD_DIM:EC_OUT] = p["Wc"]

    # rows 688:720 -- static validity mask: (t mod T) < T - window_index.
    t_in_title = np.arange(BT) % T
    wi_per_col = np.arange(OUT_DIM) // N_FILTERS
    packed[MASK_ROW:MASK_ROW + BT] = (
        t_in_title[:, None] < (T - wi_per_col)[None, :]).astype(np.float32)

    return jnp.asarray(packed)


# ---------------------------------------------------------------------------
# Wrapper: no grid, 2 input DMAs, lane-dense (B, 160) output.
# ---------------------------------------------------------------------------
@jax.jit
def new_encoder_pallas(word_emb, ent_emb, cate_one, packed_params):
    data = jnp.concatenate([word_emb, ent_emb, cate_one], axis=-1)
    data = data.reshape(BT, 2 * WORD_DIM).astype(jnp.float32)          # (BT, 64)
    return pl.pallas_call(
        _new_encoder_kernel,
        out_shape=jax.ShapeDtypeStruct((B, OUT_DIM), jnp.float32),
        in_specs=[
            pl.BlockSpec(memory_space=pltpu.MemorySpace.VMEM),         # data
            pl.BlockSpec(memory_space=pltpu.MemorySpace.VMEM),         # params
        ],
        out_specs=pl.BlockSpec(memory_space=pltpu.MemorySpace.VMEM),
        scratch_shapes=[pltpu.VMEM((BT, K_IM2COL), jnp.float32)],      # im2col
    )(data, packed_params)


# ---------------------------------------------------------------------------
# Pure-JAX reference (original unfused formulation) for validation.
# ---------------------------------------------------------------------------
def new_encoder_reference(word_emb, ent_emb, cate_one, params):
    ent = jnp.tanh(jnp.einsum("bte,ed->btd", ent_emb, params["We"]) + params["be"])
    cate = jnp.tanh(jnp.einsum("btc,cd->btd", cate_one, params["Wc"]) + params["bc"])
    channels = (word_emb, ent, cate)
    pooled = []
    for w in WINDOWS:
        L = T - w + 1
        cw = params[f"conv_w{w}"]
        acc = jnp.zeros((B, L, N_FILTERS), jnp.float32)
        for ch in range(3):
            for dw in range(w):
                acc = acc + jnp.einsum("bld,df->blf",
                                       channels[ch][:, dw:dw + L, :], cw[ch, dw])
        acc = jnp.maximum(acc + params[f"conv_b{w}"], 0.0)
        pooled.append(jnp.max(acc, axis=1))
    rep = jnp.concatenate(pooled, axis=-1)
    mean = jnp.mean(rep, axis=-1, keepdims=True)
    var = jnp.mean((rep - mean) ** 2, axis=-1, keepdims=True)
    return (rep - mean) * jax.lax.rsqrt(var + LN_EPS) * params["gamma"] + params["beta"]


def init_params(key):
    keys = jax.random.split(key, 6 + 2 * len(WINDOWS))
    p = {
        "We": 0.1 * jax.random.normal(keys[0], (ENTITY_DIM, WORD_DIM), jnp.float32),
        "be": 0.1 * jax.random.normal(keys[1], (1, WORD_DIM), jnp.float32),
        "Wc": 0.1 * jax.random.normal(keys[2], (ENTITY_CATE, WORD_DIM), jnp.float32),
        "bc": 0.1 * jax.random.normal(keys[3], (1, WORD_DIM), jnp.float32),
        "gamma": 1.0 + 0.1 * jax.random.normal(keys[4], (1, OUT_DIM), jnp.float32),
        "beta": 0.1 * jax.random.normal(keys[5], (1, OUT_DIM), jnp.float32),
    }
    for i, w in enumerate(WINDOWS):
        p[f"conv_w{w}"] = 0.1 * jax.random.normal(
            keys[6 + 2 * i], (3, w, WORD_DIM, N_FILTERS), jnp.float32)
        p[f"conv_b{w}"] = 0.1 * jax.random.normal(
            keys[7 + 2 * i], (1, N_FILTERS), jnp.float32)
    return p


if __name__ == "__main__":
    key = jax.random.PRNGKey(0)
    k_in, k_p = jax.random.split(key)
    kw, ke, kc = jax.random.split(k_in, 3)

    word_emb = jax.random.normal(kw, (B, T, WORD_DIM), jnp.float32)
    ent_emb = jax.random.normal(ke, (B, T, ENTITY_DIM), jnp.float32)
    cate_ids = jax.random.randint(kc, (B, T), 0, ENTITY_CATE)
    cate_one = jax.nn.one_hot(cate_ids, ENTITY_CATE, dtype=jnp.float32)

    params = init_params(k_p)
    packed = pack_params(params)          # init-time, NumPy, cached thereafter

    out = new_encoder_pallas(word_emb, ent_emb, cate_one, packed)
    out = jax.block_until_ready(out)

    ref = new_encoder_reference(word_emb, ent_emb, cate_one, params)
    np.testing.assert_allclose(np.asarray(out), np.asarray(ref),
                               rtol=1e-4, atol=1e-4)
    print("KERNEL_OK")
</pallas_src>

<mosaic_0001>
module attributes {stable_mosaic.version = 11 : i64} {
  func.func @_new_encoder_kernel(%arg0: memref<32x64xf32, #tpu.memory_space<vmem>>, %arg1: memref<720x160xf32, #tpu.memory_space<vmem>>, %arg2: memref<2x160xf32, #tpu.memory_space<vmem>>, %arg3: memref<32x640xf32, #tpu.memory_space<vmem>>) attributes {dimension_semantics = [], scalar_prefetch = 0 : i64, scratch_operands = 1 : i64, tpu.core_type = #tpu.core_type<tc>} {
    %cst = arith.constant 0.000000e+00 : f32
    %0 = vector.broadcast %cst : f32 to vector<32x640xf32>
    %c0 = arith.constant 0 : index
    %c0_0 = arith.constant 0 : index
    %1 = vector.load %arg3[%c0, %c0_0] : memref<32x640xf32, #tpu.memory_space<vmem>>, vector<32x640xf32>
    tpu.vector_store %arg3[%c0, %c0_0], %0 {strides = array<i32>} : memref<32x640xf32, #tpu.memory_space<vmem>>, vector<32x640xf32>,
    %c640 = arith.constant 640 : index
    %c0_1 = arith.constant 0 : index
    %2 = vector.load %arg1[%c640, %c0_1] : memref<720x160xf32, #tpu.memory_space<vmem>>, vector<8x160xf32>
    %3 = vector.extract_strided_slice %2 {offsets = [0, 0], sizes = [1, 64], strides = [1, 1]} : vector<8x160xf32> to vector<1x64xf32>
    %4 = vector.extract_strided_slice %2 {offsets = [1, 0], sizes = [1, 160], strides = [1, 1]} : vector<8x160xf32> to vector<1x160xf32>
    %5 = vector.extract_strided_slice %2 {offsets = [2, 0], sizes = [1, 160], strides = [1, 1]} : vector<8x160xf32> to vector<1x160xf32>
    %6 = vector.extract_strided_slice %2 {offsets = [3, 0], sizes = [1, 160], strides = [1, 1]} : vector<8x160xf32> to vector<1x160xf32>
    %c0_2 = arith.constant 0 : index
    %c32 = arith.constant 32 : index
    %7 = vector.load %arg0[%c0_2, %c32] : memref<32x64xf32, #tpu.memory_space<vmem>>, vector<32x32xf32>
    %c648 = arith.constant 648 : index
    %c0_3 = arith.constant 0 : index
    %8 = vector.load %arg1[%c648, %c0_3] : memref<720x160xf32, #tpu.memory_space<vmem>>, vector<32x64xf32>
    %cst_4 = arith.constant dense<0.000000e+00> : vector<32x64xf32>
    %9 = tpu.matmul %7, %8, %cst_4 {dimension_numbers = #tpu.dot_dimension_numbers<[1], [0], [0], [1], [0, 0, 1, 1], [], []>} : vector<32x32xf32>, vector<32x64xf32>, vector<32x64xf32> -> vector<32x64xf32>
    %10 = vector.broadcast %3 : vector<1x64xf32> to vector<32x64xf32>
    %11 = arith.addf %9, %10 : vector<32x64xf32>
    %12 = math.tanh %11 : vector<32x64xf32>
    %c0_5 = arith.constant 0 : index
    %c0_6 = arith.constant 0 : index
    %13 = vector.load %arg0[%c0_5, %c0_6] : memref<32x64xf32, #tpu.memory_space<vmem>>, vector<32x32xf32>
    %c0_7 = arith.constant 0 : index
    %c0_8 = arith.constant 0 : index
    %14 = vector.load %arg3[%c0_7, %c0_8] : memref<32x640xf32, #tpu.memory_space<vmem>>, vector<32x32xf32>
    tpu.vector_store %arg3[%c0_7, %c0_8], %13 {strides = array<i32>} : memref<32x640xf32, #tpu.memory_space<vmem>>, vector<32x32xf32>,
    %c0_9 = arith.constant 0 : index
    %c32_10 = arith.constant 32 : index
    %15 = vector.load %arg3[%c0_9, %c32_10] : memref<32x640xf32, #tpu.memory_space<vmem>>, vector<32x64xf32>
    tpu.vector_store %arg3[%c0_9, %c32_10], %12 {strides = array<i32>} : memref<32x640xf32, #tpu.memory_space<vmem>>, vector<32x64xf32>,
    %c1 = arith.constant 1 : index
    %c0_11 = arith.constant 0 : index
    %16 = vector.load %arg0[%c1, %c0_11] : memref<32x64xf32, #tpu.memory_space<vmem>>, vector<31x32xf32>
    %c0_12 = arith.constant 0 : index
    %c128 = arith.constant 128 : index
    %17 = vector.load %arg3[%c0_12, %c128] : memref<32x640xf32, #tpu.memory_space<vmem>>, vector<31x32xf32>
    tpu.vector_store %arg3[%c0_12, %c128], %16 {strides = array<i32>} : memref<32x640xf32, #tpu.memory_space<vmem>>, vector<31x32xf32>,
    %18 = vector.extract_strided_slice %12 {offsets = [1, 0], sizes = [31, 64], strides = [1, 1]} : vector<32x64xf32> to vector<31x64xf32>
    %c0_13 = arith.constant 0 : index
    %c160 = arith.constant 160 : index
    %19 = vector.load %arg3[%c0_13, %c160] : memref<32x640xf32, #tpu.memory_space<vmem>>, vector<31x64xf32>
    tpu.vector_store %arg3[%c0_13, %c160], %18 {strides = array<i32>} : memref<32x640xf32, #tpu.memory_space<vmem>>, vector<31x64xf32>,
    %c2 = arith.constant 2 : index
    %c0_14 = arith.constant 0 : index
    %20 = vector.load %arg0[%c2, %c0_14] : memref<32x64xf32, #tpu.memory_space<vmem>>, vector<30x32xf32>
    %c0_15 = arith.constant 0 : index
    %c256 = arith.constant 256 : index
    %21 = vector.load %arg3[%c0_15, %c256] : memref<32x640xf32, #tpu.memory_space<vmem>>, vector<30x32xf32>
    tpu.vector_store %arg3[%c0_15, %c256], %20 {strides = array<i32>} : memref<32x640xf32, #tpu.memory_space<vmem>>, vector<30x32xf32>,
    %22 = vector.extract_strided_slice %12 {offsets = [2, 0], sizes = [30, 64], strides = [1, 1]} : vector<32x64xf32> to vector<30x64xf32>
    %c0_16 = arith.constant 0 : index
    %c288 = arith.constant 288 : index
    %23 = vector.load %arg3[%c0_16, %c288] : memref<32x640xf32, #tpu.memory_space<vmem>>, vector<30x64xf32>
    tpu.vector_store %arg3[%c0_16, %c288], %22 {strides = array<i32>} : memref<32x640xf32, #tpu.memory_space<vmem>>, vector<30x64xf32>,
    %c3 = arith.constant 3 : index
    %c0_17 = arith.constant 0 : index
    %24 = vector.load %arg0[%c3, %c0_17] : memref<32x64xf32, #tpu.memory_space<vmem>>, vector<29x32xf32>
    %c0_18 = arith.constant 0 : index
    %c384 = arith.constant 384 : index
    %25 = vector.load %arg3[%c0_18, %c384] : memref<32x640xf32, #tpu.memory_space<vmem>>, vector<29x32xf32>
    tpu.vector_store %arg3[%c0_18, %c384], %24 {strides = array<i32>} : memref<32x640xf32, #tpu.memory_space<vmem>>, vector<29x32xf32>,
    %26 = vector.extract_strided_slice %12 {offsets = [3, 0], sizes = [29, 64], strides = [1, 1]} : vector<32x64xf32> to vector<29x64xf32>
    %c0_19 = arith.constant 0 : index
    %c416 = arith.constant 416 : index
    %27 = vector.load %arg3[%c0_19, %c416] : memref<32x640xf32, #tpu.memory_space<vmem>>, vector<29x64xf32>
    tpu.vector_store %arg3[%c0_19, %c416], %26 {strides = array<i32>} : memref<32x640xf32, #tpu.memory_space<vmem>>, vector<29x64xf32>,
    %c4 = arith.constant 4 : index
    %c0_20 = arith.constant 0 : index
    %28 = vector.load %arg0[%c4, %c0_20] : memref<32x64xf32, #tpu.memory_space<vmem>>, vector<28x32xf32>
    %c0_21 = arith.constant 0 : index
    %c512 = arith.constant 512 : index
    %29 = vector.load %arg3[%c0_21, %c512] : memref<32x640xf32, #tpu.memory_space<vmem>>, vector<28x32xf32>
    tpu.vector_store %arg3[%c0_21, %c512], %28 {strides = array<i32>} : memref<32x640xf32, #tpu.memory_space<vmem>>, vector<28x32xf32>,
    %30 = vector.extract_strided_slice %12 {offsets = [4, 0], sizes = [28, 64], strides = [1, 1]} : vector<32x64xf32> to vector<28x64xf32>
    %c0_22 = arith.constant 0 : index
    %c544 = arith.constant 544 : index
    %31 = vector.load %arg3[%c0_22, %c544] : memref<32x640xf32, #tpu.memory_space<vmem>>, vector<28x64xf32>
    tpu.vector_store %arg3[%c0_22, %c544], %30 {strides = array<i32>} : memref<32x640xf32, #tpu.memory_space<vmem>>, vector<28x64xf32>,
    %c0_23 = arith.constant 0 : index
    %c0_24 = arith.constant 0 : index
    %32 = vector.load %arg3[%c0_23, %c0_24] : memref<32x640xf32, #tpu.memory_space<vmem>>, vector<32x640xf32>
    %c0_25 = arith.constant 0 : index
    %c0_26 = arith.constant 0 : index
    %33 = vector.load %arg1[%c0_25, %c0_26] : memref<720x160xf32, #tpu.memory_space<vmem>>, vector<640x160xf32>
    %cst_27 = arith.constant dense<0.000000e+00> : vector<32x160xf32>
    %34 = tpu.matmul %32, %33, %cst_27 {dimension_numbers = #tpu.dot_dimension_numbers<[1], [0], [0], [1], [0, 0, 1, 1], [], []>} : vector<32x640xf32>, vector<640x160xf32>, vector<32x160xf32> -> vector<32x160xf32>
    %35 = vector.broadcast %4 : vector<1x160xf32> to vector<32x160xf32>
    %36 = arith.addf %34, %35 : vector<32x160xf32>
    %cst_28 = arith.constant 0.000000e+00 : f32
    %37 = vector.broadcast %cst_28 : f32 to vector<32x160xf32>
    %38 = arith.maximumf %36, %37 : vector<32x160xf32>
    %c688 = arith.constant 688 : index
    %c0_29 = arith.constant 0 : index
    %39 = vector.load %arg1[%c688, %c0_29] : memref<720x160xf32, #tpu.memory_space<vmem>>, vector<32x160xf32>
    %40 = arith.mulf %38, %39 : vector<32x160xf32>
    %41 = vector.shape_cast %40 : vector<32x160xf32> to vector<2x16x160xf32>
    %cst_30 = arith.constant dense<0xFF800000> : vector<2x160xf32>
    %42 = vector.multi_reduction <maximumf>, %41, %cst_30 [1] : vector<2x16x160xf32> to vector<2x160xf32>
    %cst_31 = arith.constant dense<0.000000e+00> : vector<2xf32>
    %43 = vector.multi_reduction <add>, %42, %cst_31 [1] : vector<2x160xf32> to vector<2xf32>
    %44 = vector.shape_cast %43 : vector<2xf32> to vector<2x1xf32>
    %cst_32 = arith.constant 1.600000e+02 : f32
    %45 = vector.broadcast %cst_32 : f32 to vector<2x1xf32>
    %46 = arith.divf %44, %45 : vector<2x1xf32>
    %47 = vector.broadcast %46 : vector<2x1xf32> to vector<2x160xf32>
    %48 = arith.subf %42, %47 : vector<2x160xf32>
    %49 = arith.mulf %48, %48 : vector<2x160xf32>
    %cst_33 = arith.constant dense<0.000000e+00> : vector<2xf32>
    %50 = vector.multi_reduction <add>, %49, %cst_33 [1] : vector<2x160xf32> to vector<2xf32>
    %51 = vector.shape_cast %50 : vector<2xf32> to vector<2x1xf32>
    %cst_34 = arith.constant 1.600000e+02 : f32
    %52 = vector.broadcast %cst_34 : f32 to vector<2x1xf32>
    %53 = arith.divf %51, %52 : vector<2x1xf32>
    %54 = vector.broadcast %46 : vector<2x1xf32> to vector<2x160xf32>
    %55 = arith.subf %42, %54 : vector<2x160xf32>
    %cst_35 = arith.constant 9.99999974E-6 : f32
    %56 = vector.broadcast %cst_35 : f32 to vector<2x1xf32>
    %57 = arith.addf %53, %56 : vector<2x1xf32>
    %58 = math.rsqrt %57 : vector<2x1xf32>
    %59 = vector.broadcast %58 : vector<2x1xf32> to vector<2x160xf32>
    %60 = arith.mulf %55, %59 : vector<2x160xf32>
    %61 = vector.broadcast %5 : vector<1x160xf32> to vector<2x160xf32>
    %62 = arith.mulf %60, %61 : vector<2x160xf32>
    %63 = vector.broadcast %6 : vector<1x160xf32> to vector<2x160xf32>
    %64 = arith.addf %62, %63 : vector<2x160xf32>
    %c0_36 = arith.constant 0 : index
    %c0_37 = arith.constant 0 : index
    %65 = vector.load %arg2[%c0_36, %c0_37] : memref<2x160xf32, #tpu.memory_space<vmem>>, vector<2x160xf32>
    tpu.vector_store %arg2[%c0_36, %c0_37], %64 {strides = array<i32>} : memref<2x160xf32, #tpu.memory_space<vmem>>, vector<2x160xf32>,
    return
  }
}

</mosaic_0001>

<llo_original>
// kernel: new_encoder_pallas.1
$region0: #{new_encoder_pallas.1}
  #allocation0 [shape = 'u32[]', space=smem, size = 0x4, offset = 0x4, fixed_abs, tag = 'smem constant byte address 0x4 - core index']
  #allocation1 [shape = 'u32[144,128]{1,0:T(1,128)}', space=vmem, size = 0x12000, scoped, tag = 'internal scratch']
  #allocation2 [shape = 'f32[32,640]{1,0:T(8,128)}', space=vmem, size = 0x14000, scoped, tag = 'scratch operand']
  %s0 = inlined_call_operand.vmem [shape: f32[32,64], index: 0, kind: input, shape index: {}]
  %s1 = inlined_call_operand.vmem [shape: f32[720,160], index: 1, kind: input, shape index: {}]
  %s2 = inlined_call_operand.hbm [shape: f32[2,160], index: 2, kind: output, shape index: {}]
  %s3 = sld [smem:[#allocation0]]
  $region18: #{new_encoder_pallas.1} parent=0
    _
  %s5 = ssub.s32 1, %s3
  %s6 = scalar_select 0, %s5, %s3
  $region1: #{new_encoder_pallas.1} parent=0
    #allocation3 [shape = 'u8[2048]{0}', space=vmem, size = 0x800, scoped, tag = 'output window, operand 0, single buffered']
    #allocation4 [shape = 's32[1]{0}', space=sflag, size = 0x4, scoped, tag = 'scoped memory for new_encoder_pallas.1']
    %7 = vsyncpa [#allocation4], 0
    // Predicated region
    $region2: #{new_encoder_pallas.1} parent=1 // pred_check
      _
    $region3: #{new_encoder_pallas.1} parent=1 // pred_check_branch
      %9 = sbr.rel (0) target = $region5
    $region4: #{new_encoder_pallas.1} parent=1 // pred_region
      _
    $region5: #{new_encoder_pallas.1} parent=1 // pred_fallthru
      _
    // Predicated region
    $region6: #{new_encoder_pallas.1} parent=1 // pred_check
      _
    $region7: #{new_encoder_pallas.1} parent=1 // pred_check_branch
      %11 = sbr.rel (0) target = $region9
    $region8: #{new_encoder_pallas.1} parent=1 // pred_region
      _
    $region9: #{new_encoder_pallas.1} parent=1 // pred_fallthru
      _
    %12 = vst [vmem:[#allocation2] sm:$0xff] 0.0
    %13 = vst [vmem:[#allocation2 + $0x8] sm:$0xff] 0.0
    %14 = vst [vmem:[#allocation2 + $0x10] sm:$0xff] 0.0
    %15 = vst [vmem:[#allocation2 + $0x18] sm:$0xff] 0.0
    %16 = vst [vmem:[#allocation2 + $0x20] sm:$0xff] 0.0
    %17 = vst [vmem:[#allocation2 + $0x28] sm:$0xff] 0.0
    %18 = vst [vmem:[#allocation2 + $0x30] sm:$0xff] 0.0
    %19 = vst [vmem:[#allocation2 + $0x38] sm:$0xff] 0.0
    %20 = vst [vmem:[#allocation2 + $0x40] sm:$0xff] 0.0
    %21 = vst [vmem:[#allocation2 + $0x48] sm:$0xff] 0.0
    %22 = vst [vmem:[#allocation2 + $0x50] sm:$0xff] 0.0
    %23 = vst [vmem:[#allocation2 + $0x58] sm:$0xff] 0.0
    %24 = vst [vmem:[#allocation2 + $0x60] sm:$0xff] 0.0
    %25 = vst [vmem:[#allocation2 + $0x68] sm:$0xff] 0.0
    %26 = vst [vmem:[#allocation2 + $0x70] sm:$0xff] 0.0
    %27 = vst [vmem:[#allocation2 + $0x78] sm:$0xff] 0.0
    %28 = vst [vmem:[#allocation2 + $0x80] sm:$0xff] 0.0
    %29 = vst [vmem:[#allocation2 + $0x88] sm:$0xff] 0.0
    %30 = vst [vmem:[#allocation2 + $0x90] sm:$0xff] 0.0
    %31 = vst [vmem:[#allocation2 + $0x98] sm:$0xff] 0.0
    %v32 = vld [vmem:[%s1 + $0x500] sm:$0xff]
    %v33 = vld [vmem:[%s1 + $0x508] sm:$0xff]
    %v34 = vld [vmem:[%s0] sm:$0xff]
    %v35 = vld [vmem:[%s0 + $0x8] sm:$0xff]
    %v36 = vld [vmem:[%s0 + $0x10] sm:$0xff]
    %v37 = vld [vmem:[%s0 + $0x18] sm:$0xff]
    %v38 = vld [vmem:[%s1 + $0x510] sm:$0xff]
    %v39 = vld [vmem:[%s1 + $0x520] sm:$0xff]
    %v40 = vld [vmem:[%s1 + $0x530] sm:$0xff]
    %v41 = vld [vmem:[%s1 + $0x540] sm:$0xff]
    %v42 = vlaneseq
    %v43 = vshrl.u32 %v42, 7
    %v44 = vsub.s32 0, %v43
    %v45 = vrot.slane %v32, %v44
    %50 = vrot.lane.b32.xlu0 %v34, 96
    %v51 = vpop.permute.xlu0 %50
    %52 = vrot.lane.b32.xlu0 %v35, 96
    %v53 = vpop.permute.xlu0 %52
    %54 = vrot.lane.b32.xlu0 %v36, 96
    %v55 = vpop.permute.xlu0 %54
    %56 = vrot.lane.b32.xlu0 %v37, 96
    %v57 = vpop.permute.xlu0 %56
    %vm58 = vcmask 261120
    %v59 = vsel %vm58, %v51, 0
    %v61 = vsel %vm58, %v53, 0
    %v63 = vsel %vm58, %v55, 0
    %v65 = vsel %vm58, %v57, 0
    %67 = vmatprep.subr.mxu0 0.0
    %68 = vmatpush1.msra.mxu0 0.0
    %69 = vmatprep.subr.mxu0 0.0
    %70 = vmatpush1.msra.mxu0 0.0
    %71 = vmatprep.subr.mxu0 0.0
    %72 = vmatpush1.msra.mxu0 0.0
    %73 = vmatprep.subr.mxu0 0.0
    %74 = vmatpush1.msra.mxu0 0.0
    %75 = vmatprep.subr.mxu0 0.0
    %76 = vmatpush1.msra.mxu0 0.0
    %77 = vmatprep.subr.mxu0 0.0
    %78 = vmatpush1.msra.mxu0 0.0
    %79 = vmatprep.subr.mxu0 0.0
    %80 = vmatpush1.msra.mxu0 0.0
    %81 = vmatprep.subr.mxu0 0.0
    %82 = vmatpush1.msra.mxu0 0.0
    %83 = vmatprep.subr.mxu0 0.0
    %84 = vmatpush1.msra.mxu0 0.0
    %85 = vmatprep.subr.mxu0 0.0
    %86 = vmatpush1.msra.mxu0 0.0
    %87 = vmatprep.subr.mxu0 0.0
    %88 = vmatpush1.msra.mxu0 0.0
    %89 = vmatprep.subr.mxu0 0.0
    %90 = vmatpush1.msra.mxu0 0.0
    %91 = vmatprep.subr.mxu0 0.0
    %92 = vmatpush1.msra.mxu0 %v41
    %93 = vmatprep.subr.mxu0 0.0
    %94 = vmatpush1.msra.mxu0 %v40
    %95 = vmatprep.subr.mxu0 0.0
    %96 = vmatpush1.msra.mxu0 %v39
    %97 = vmatprep.subr.mxu0 0.0
    %98 = vmatpush1.msra.mxu0 %v38
    %99 = vmatprep.subr.mxu0 0.0
    %100 = vmatpush2.msra.mxu0 0.0
    %101 = vmatprep.subr.mxu0 0.0
    %102 = vmatpush2.msra.mxu0 0.0
    %103 = vmatprep.subr.mxu0 0.0
    %104 = vmatpush2.msra.mxu0 0.0
    %105 = vmatprep.subr.mxu0 0.0
    %106 = vmatpush2.msra.mxu0 0.0
    %107 = vmatprep.subr.mxu0 0.0
    %108 = vmatpush2.msra.mxu0 0.0
    %109 = vmatprep.subr.mxu0 0.0
    %110 = vmatpush2.msra.mxu0 0.0
    %111 = vmatprep.subr.mxu0 0.0
    %112 = vmatpush2.msra.mxu0 0.0
    %113 = vmatprep.subr.mxu0 0.0
    %114 = vmatpush2.msra.mxu0 0.0
    %115 = vmatprep.subr.mxu0 0.0
    %116 = vmatpush2.msra.mxu0 0.0
    %117 = vmatprep.subr.mxu0 0.0
    %118 = vmatpush2.msra.mxu0 0.0
    %119 = vmatprep.subr.mxu0 0.0
    %120 = vmatpush2.msra.mxu0 0.0
    %121 = vmatprep.subr.mxu0 0.0
    %122 = vmatpush2.msra.mxu0 0.0
    %123 = vmatprep.subr.mxu0 0.0
    %124 = vmatpush2.msra.mxu0 0.0
    %125 = vmatprep.subr.mxu0 0.0
    %126 = vmatpush2.msra.mxu0 0.0
    %127 = vmatprep.subr.mxu0 0.0
    %128 = vmatpush2.msra.mxu0 0.0
    %129 = vmatprep.subr.mxu0 0.0
    %130 = vmatpush2.msra.mxu0 0.0
    %131 = vmatprep.mubr.f32.mxu0 0.0
    %132 = vmatmul.mubr.f32.gmra.mxu0 %v59
    %v133 = vpop.f32.mrf.mxu0
    %v134 = vadd.f32 %v45, %v133
    %v135 = vpop.f32.mrf.mxu0
    %136 = vmatprep.mubr.f32.mxu0 0.0
    %137 = vmatmul.mubr.f32.gmra.mxu0 %v61
    %v138 = vpop.f32.mrf.mxu0
    %v139 = vadd.f32 %v45, %v138
    %v140 = vpop.f32.mrf.mxu0
    %141 = vmatprep.mubr.f32.mxu0 0.0
    %142 = vmatmul.mubr.f32.gmra.mxu0 %v63
    %v143 = vpop.f32.mrf.mxu0
    %v144 = vadd.f32 %v45, %v143
    %v145 = vpop.f32.mrf.mxu0
    %146 = vmatprep.mubr.f32.mxu0 0.0
    %147 = vmatmul.mubr.f32.gmra.mxu0 %v65
    %v148 = vpop.f32.mrf.mxu0
    %v149 = vadd.f32 %v45, %v148
    %v150 = vpop.f32.mrf.mxu0
    %151 = vdwg.mxu0
    %v152 = vtanh.pop %v134
    %v153 = vtanh.pop %v139
    %v154 = vtanh.pop %v144
    %v155 = vtanh.pop %v149
    %156 = vst.msk [vmem:[#allocation2] sm:$0xff] %vm58, %v34
    %157 = vst.msk [vmem:[#allocation2 + $0x28] sm:$0xff] %vm58, %v35
    %158 = vst.msk [vmem:[#allocation2 + $0x50] sm:$0xff] %vm58, %v36
    %159 = vst.msk [vmem:[#allocation2 + $0x78] sm:$0xff] %vm58, %v37
    %164 = vrot.lane.b32.xlu0 %v152, 32
    %v165 = vpop.permute.xlu0 %164
    %166 = vrot.lane.b32.xlu0 %v153, 32
    %v167 = vpop.permute.xlu0 %166
    %168 = vrot.lane.b32.xlu0 %v154, 32
    %v169 = vpop.permute.xlu0 %168
    %170 = vrot.lane.b32.xlu0 %v155, 32
    %v171 = vpop.permute.xlu0 %170
    %vm176 = vcmask 785664
    %177 = vst.msk [vmem:[#allocation2] sm:$0xff] %vm176, %v165
    %178 = vst.msk [vmem:[#allocation2 + $0x28] sm:$0xff] %vm176, %v167
    %179 = vst.msk [vmem:[#allocation2 + $0x50] sm:$0xff] %vm176, %v169
    %180 = vst.msk [vmem:[#allocation2 + $0x78] sm:$0xff] %vm176, %v171
    %v181 = vld [vmem:[%s0 + $0x1] sm:$0xff]
    %v182 = vld [vmem:[%s0 + $0x9] sm:$0xff]
    %v183 = vld [vmem:[%s0 + $0x11] sm:$0xff]
    %v184 = vld [vmem:[%s0 + $0x19] sm:$0x7f]
    %185 = vst.msk [vmem:[#allocation2 + $0x8] sm:$0xff] %vm58, %v181
    %186 = vst.msk [vmem:[#allocation2 + $0x30] sm:$0xff] %vm58, %v182
    %187 = vst.msk [vmem:[#allocation2 + $0x58] sm:$0xff] %vm58, %v183
    %vm188 = vcmask 260096
    %189 = vst.msk [vmem:[#allocation2 + $0x80] sm:$0x7f] %vm188, %v184
    %vm190 = vcmask 1046528
    %v191 = vrot.slane %v152, 1
    %v192 = vrot.slane %v153, 1
    %v193 = vsel %vm190, %v191, %v192
    %v194 = vrot.slane %v154, 1
    %v195 = vsel %vm190, %v192, %v194
    %v196 = vrot.slane %v155, 1
    %v197 = vsel %vm190, %v194, %v196
    %198 = vrot.lane.b32.xlu0 %v193, 32
    %v199 = vpop.permute.xlu0 %198
    %200 = vrot.lane.b32.xlu0 %v195, 32
    %v201 = vpop.permute.xlu0 %200
    %202 = vrot.lane.b32.xlu0 %v197, 32
    %v203 = vpop.permute.xlu0 %202
    %204 = vrot.lane.b32.xlu0 %v196, 32
    %v205 = vpop.permute.xlu0 %204
    %210 = vst.msk [vmem:[#allocation2 + $0x8] sm:$0xff] %vm176, %v199
    %211 = vst.msk [vmem:[#allocation2 + $0x30] sm:$0xff] %vm176, %v201
    %212 = vst.msk [vmem:[#allocation2 + $0x58] sm:$0xff] %vm176, %v203
    %vm213 = vcmask 784640
    %214 = vst.msk [vmem:[#allocation2 + $0x80] sm:$0x7f] %vm213, %v205
    %v215 = vld [vmem:[%s0 + $0x2] sm:$0xff]
    %v216 = vld [vmem:[%s0 + $0xa] sm:$0xff]
    %v217 = vld [vmem:[%s0 + $0x12] sm:$0xff]
    %v218 = vld [vmem:[%s0 + $0x1a] sm:$0x3f]
    %219 = vst.msk [vmem:[#allocation2 + $0x10] sm:$0xff] %vm58, %v215
    %220 = vst.msk [vmem:[#allocation2 + $0x38] sm:$0xff] %vm58, %v216
    %221 = vst.msk [vmem:[#allocation2 + $0x60] sm:$0xff] %vm58, %v217
    %vm222 = vcmask 259072
    %223 = vst.msk [vmem:[#allocation2 + $0x88] sm:$0x3f] %vm222, %v218
    %vm224 = vcmask 1045504
    %v225 = vrot.slane %v152, 2
    %v226 = vrot.slane %v153, 2
    %v227 = vsel %vm224, %v225, %v226
    %v228 = vrot.slane %v154, 2
    %v229 = vsel %vm224, %v226, %v228
    %v230 = vrot.slane %v155, 2
    %v231 = vsel %vm224, %v228, %v230
    %232 = vrot.lane.b32.xlu0 %v227, 32
    %v233 = vpop.permute.xlu0 %232
    %234 = vrot.lane.b32.xlu0 %v229, 32
    %v235 = vpop.permute.xlu0 %234
    %236 = vrot.lane.b32.xlu0 %v231, 32
    %v237 = vpop.permute.xlu0 %236
    %238 = vrot.lane.b32.xlu0 %v230, 32
    %v239 = vpop.permute.xlu0 %238
    %244 = vst.msk [vmem:[#allocation2 + $0x10] sm:$0xff] %vm176, %v233
    %245 = vst.msk [vmem:[#allocation2 + $0x38] sm:$0xff] %vm176, %v235
    %246 = vst.msk [vmem:[#allocation2 + $0x60] sm:$0xff] %vm176, %v237
    %vm247 = vcmask 783616
    %248 = vst.msk [vmem:[#allocation2 + $0x88] sm:$0x3f] %vm247, %v239
    %v249 = vld [vmem:[%s0 + $0x3] sm:$0xff]
    %v250 = vld [vmem:[%s0 + $0xb] sm:$0xff]
    %v251 = vld [vmem:[%s0 + $0x13] sm:$0xff]
    %v252 = vld [vmem:[%s0 + $0x1b] sm:$0x1f]
    %253 = vst.msk [vmem:[#allocation2 + $0x18] sm:$0xff] %vm58, %v249
    %254 = vst.msk [vmem:[#allocation2 + $0x40] sm:$0xff] %vm58, %v250
    %255 = vst.msk [vmem:[#allocation2 + $0x68] sm:$0xff] %vm58, %v251
    %vm256 = vcmask 258048
    %257 = vst.msk [vmem:[#allocation2 + $0x90] sm:$0x1f] %vm256, %v252
    %vm258 = vcmask 1044480
    %v259 = vrot.slane %v152, 3
    %v260 = vrot.slane %v153, 3
    %v261 = vsel %vm258, %v259, %v260
    %v262 = vrot.slane %v154, 3
    %v263 = vsel %vm258, %v260, %v262
    %v264 = vrot.slane %v155, 3
    %v265 = vsel %vm258, %v262, %v264
    %266 = vrot.lane.b32.xlu0 %v261, 32
    %v267 = vpop.permute.xlu0 %266
    %268 = vrot.lane.b32.xlu0 %v263, 32
    %v269 = vpop.permute.xlu0 %268
    %270 = vrot.lane.b32.xlu0 %v265, 32
    %v271 = vpop.permute.xlu0 %270
    %272 = vrot.lane.b32.xlu0 %v264, 32
    %v273 = vpop.permute.xlu0 %272
    %278 = vst.msk [vmem:[#allocation2 + $0x18] sm:$0xff] %vm176, %v267
    %279 = vst.msk [vmem:[#allocation2 + $0x40] sm:$0xff] %vm176, %v269
    %280 = vst.msk [vmem:[#allocation2 + $0x68] sm:$0xff] %vm176, %v271
    %vm281 = vcmask 782592
    %282 = vst.msk [vmem:[#allocation2 + $0x90] sm:$0x1f] %vm281, %v273
    %v283 = vld [vmem:[%s0 + $0x4] sm:$0xff]
    %v284 = vld [vmem:[%s0 + $0xc] sm:$0xff]
    %v285 = vld [vmem:[%s0 + $0x14] sm:$0xff]
    %v286 = vld [vmem:[%s0 + $0x1c] sm:$0xf]
    %287 = vst.msk [vmem:[#allocation2 + $0x20] sm:$0xff] %vm58, %v283
    %288 = vst.msk [vmem:[#allocation2 + $0x48] sm:$0xff] %vm58, %v284
    %289 = vst.msk [vmem:[#allocation2 + $0x70] sm:$0xff] %vm58, %v285
    %vm290 = vcmask 257024
    %291 = vst.msk [vmem:[#allocation2 + $0x98] sm:$0xf] %vm290, %v286
    %vm292 = vcmask 1043456
    %v293 = vrot.slane %v152, 4
    %v294 = vrot.slane %v153, 4
    %v295 = vsel %vm292, %v293, %v294
    %v296 = vrot.slane %v154, 4
    %v297 = vsel %vm292, %v294, %v296
    %v298 = vrot.slane %v155, 4
    %v299 = vsel %vm292, %v296, %v298
    %300 = vrot.lane.b32.xlu0 %v295, 32
    %v301 = vpop.permute.xlu0 %300
    %302 = vrot.lane.b32.xlu0 %v297, 32
    %v303 = vpop.permute.xlu0 %302
    %304 = vrot.lane.b32.xlu0 %v299, 32
    %v305 = vpop.permute.xlu0 %304
    %306 = vrot.lane.b32.xlu0 %v298, 32
    %v307 = vpop.permute.xlu0 %306
    %312 = vst.msk [vmem:[#allocation2 + $0x20] sm:$0xff] %vm176, %v301
    %313 = vst.msk [vmem:[#allocation2 + $0x48] sm:$0xff] %vm176, %v303
    %314 = vst.msk [vmem:[#allocation2 + $0x70] sm:$0xff] %vm176, %v305
    %vm315 = vcmask 781568
    %316 = vst.msk [vmem:[#allocation2 + $0x98] sm:$0xf] %vm315, %v307
    %v317 = vld [vmem:[#allocation2] sm:$0xff]
    %v318 = vld [vmem:[#allocation2 + $0x8] sm:$0xff]
    %v319 = vld [vmem:[#allocation2 + $0x10] sm:$0xff]
    %v320 = vld [vmem:[#allocation2 + $0x18] sm:$0xff]
    %v321 = vld [vmem:[#allocation2 + $0x20] sm:$0xff]
    %v322 = vld [vmem:[#allocation2 + $0x28] sm:$0xff]
    %v323 = vld [vmem:[#allocation2 + $0x30] sm:$0xff]
    %v324 = vld [vmem:[#allocation2 + $0x38] sm:$0xff]
    %v325 = vld [vmem:[#allocation2 + $0x40] sm:$0xff]
    %v326 = vld [vmem:[#allocation2 + $0x48] sm:$0xff]
    %v327 = vld [vmem:[#allocation2 + $0x50] sm:$0xff]
    %v328 = vld [vmem:[#allocation2 + $0x58] sm:$0xff]
    %v329 = vld [vmem:[#allocation2 + $0x60] sm:$0xff]
    %v330 = vld [vmem:[#allocation2 + $0x68] sm:$0xff]
    %v331 = vld [vmem:[#allocation2 + $0x70] sm:$0xff]
    %v332 = vld [vmem:[#allocation2 + $0x78] sm:$0xff]
    %v333 = vld [vmem:[#allocation2 + $0x80] sm:$0xff]
    %v334 = vld [vmem:[#allocation2 + $0x88] sm:$0xff]
    %v335 = vld [vmem:[#allocation2 + $0x90] sm:$0xff]
    %v336 = vld [vmem:[#allocation2 + $0x98] sm:$0xff]
    %v337 = vld [vmem:[%s1] sm:$0xff]
    %v338 = vld [vmem:[%s1 + $0x8] sm:$0xff]
    %v339 = vld [vmem:[%s1 + $0x10] sm:$0xff]
    %v340 = vld [vmem:[%s1 + $0x18] sm:$0xff]
    %v341 = vld [vmem:[%s1 + $0x20] sm:$0xff]
    %v342 = vld [vmem:[%s1 + $0x28] sm:$0xff]
    %v343 = vld [vmem:[%s1 + $0x30] sm:$0xff]
    %v344 = vld [vmem:[%s1 + $0x38] sm:$0xff]
    %v345 = vld [vmem:[%s1 + $0x40] sm:$0xff]
    %v346 = vld [vmem:[%s1 + $0x48] sm:$0xff]
    %v347 = vld [vmem:[%s1 + $0x50] sm:$0xff]
    %v348 = vld [vmem:[%s1 + $0x58] sm:$0xff]
    %v349 = vld [vmem:[%s1 + $0x60] sm:$0xff]
    %v350 = vld [vmem:[%s1 + $0x68] sm:$0xff]
    %v351 = vld [vmem:[%s1 + $0x70] sm:$0xff]
    %v352 = vld [vmem:[%s1 + $0x78] sm:$0xff]
    %v353 = vld [vmem:[%s1 + $0x80] sm:$0xff]
    %v354 = vld [vmem:[%s1 + $0x88] sm:$0xff]
    %v355 = vld [vmem:[%s1 + $0x90] sm:$0xff]
    %v356 = vld [vmem:[%s1 + $0x98] sm:$0xff]
    %v357 = vld [vmem:[%s1 + $0xa0] sm:$0xff]
    %v358 = vld [vmem:[%s1 + $0xa8] sm:$0xff]
    %v359 = vld [vmem:[%s1 + $0xb0] sm:$0xff]
    %v360 = vld [vmem:[%s1 + $0xb8] sm:$0xff]
    %v361 = vld [vmem:[%s1 + $0xc0] sm:$0xff]
    %v362 = vld [vmem:[%s1 + $0xc8] sm:$0xff]
    %v363 = vld [vmem:[%s1 + $0xd0] sm:$0xff]
    %v364 = vld [vmem:[%s1 + $0xd8] sm:$0xff]
    %v365 = vld [vmem:[%s1 + $0xe0] sm:$0xff]
    %v366 = vld [vmem:[%s1 + $0xe8] sm:$0xff]
    %v367 = vld [vmem:[%s1 + $0xf0] sm:$0xff]
    %v368 = vld [vmem:[%s1 + $0xf8] sm:$0xff]
    %v369 = vld [vmem:[%s1 + $0x100] sm:$0xff]
    %v370 = vld [vmem:[%s1 + $0x108] sm:$0xff]
    %v371 = vld [vmem:[%s1 + $0x110] sm:$0xff]
    %v372 = vld [vmem:[%s1 + $0x118] sm:$0xff]
    %v373 = vld [vmem:[%s1 + $0x120] sm:$0xff]
    %v374 = vld [vmem:[%s1 + $0x128] sm:$0xff]
    %v375 = vld [vmem:[%s1 + $0x130] sm:$0xff]
    %v376 = vld [vmem:[%s1 + $0x138] sm:$0xff]
    %v377 = vld [vmem:[%s1 + $0x140] sm:$0xff]
    %v378 = vld [vmem:[%s1 + $0x148] sm:$0xff]
    %v379 = vld [vmem:[%s1 + $0x150] sm:$0xff]
    %v380 = vld [vmem:[%s1 + $0x158] sm:$0xff]
    %v381 = vld [vmem:[%s1 + $0x160] sm:$0xff]
    %v382 = vld [vmem:[%s1 + $0x168] sm:$0xff]
    %v383 = vld [vmem:[%s1 + $0x170] sm:$0xff]
    %v384 = vld [vmem:[%s1 + $0x178] sm:$0xff]
    %v385 = vld [vmem:[%s1 + $0x180] sm:$0xff]
    %v386 = vld [vmem:[%s1 + $0x188] sm:$0xff]
    %v387 = vld [vmem:[%s1 + $0x190] sm:$0xff]
    %v388 = vld [vmem:[%s1 + $0x198] sm:$0xff]
    %v389 = vld [vmem:[%s1 + $0x1a0] sm:$0xff]
    %v390 = vld [vmem:[%s1 + $0x1a8] sm:$0xff]
    %v391 = vld [vmem:[%s1 + $0x1b0] sm:$0xff]
    %v392 = vld [vmem:[%s1 + $0x1b8] sm:$0xff]
    %v393 = vld [vmem:[%s1 + $0x1c0] sm:$0xff]
    %v394 = vld [vmem:[%s1 + $0x1c8] sm:$0xff]
    %v395 = vld [vmem:[%s1 + $0x1d0] sm:$0xff]
    %v396 = vld [vmem:[%s1 + $0x1d8] sm:$0xff]
    %v397 = vld [vmem:[%s1 + $0x1e0] sm:$0xff]
    %v398 = vld [vmem:[%s1 + $0x1e8] sm:$0xff]
    %v399 = vld [vmem:[%s1 + $0x1f0] sm:$0xff]
    %v400 = vld [vmem:[%s1 + $0x1f8] sm:$0xff]
    %v401 = vld [vmem:[%s1 + $0x200] sm:$0xff]
    %v402 = vld [vmem:[%s1 + $0x208] sm:$0xff]
    %v403 = vld [vmem:[%s1 + $0x210] sm:$0xff]
    %v404 = vld [vmem:[%s1 + $0x218] sm:$0xff]
    %v405 = vld [vmem:[%s1 + $0x220] sm:$0xff]
    %v406 = vld [vmem:[%s1 + $0x228] sm:$0xff]
    %v407 = vld [vmem:[%s1 + $0x230] sm:$0xff]
    %v408 = vld [vmem:[%s1 + $0x238] sm:$0xff]
    %v409 = vld [vmem:[%s1 + $0x240] sm:$0xff]
    %v410 = vld [vmem:[%s1 + $0x248] sm:$0xff]
    %v411 = vld [vmem:[%s1 + $0x250] sm:$0xff]
    %v412 = vld [vmem:[%s1 + $0x258] sm:$0xff]
    %v413 = vld [vmem:[%s1 + $0x260] sm:$0xff]
    %v414 = vld [vmem:[%s1 + $0x268] sm:$0xff]
    %v415 = vld [vmem:[%s1 + $0x270] sm:$0xff]
    %v416 = vld [vmem:[%s1 + $0x278] sm:$0xff]
    %v417 = vld [vmem:[%s1 + $0x280] sm:$0xff]
    %v418 = vld [vmem:[%s1 + $0x288] sm:$0xff]
    %v419 = vld [vmem:[%s1 + $0x290] sm:$0xff]
    %v420 = vld [vmem:[%s1 + $0x298] sm:$0xff]
    %v421 = vld [vmem:[%s1 + $0x2a0] sm:$0xff]
    %v422 = vld [vmem:[%s1 + $0x2a8] sm:$0xff]
    %v423 = vld [vmem:[%s1 + $0x2b0] sm:$0xff]
    %v424 = vld [vmem:[%s1 + $0x2b8] sm:$0xff]
    %v425 = vld [vmem:[%s1 + $0x2c0] sm:$0xff]
    %v426 = vld [vmem:[%s1 + $0x2c8] sm:$0xff]
    %v427 = vld [vmem:[%s1 + $0x2d0] sm:$0xff]
    %v428 = vld [vmem:[%s1 + $0x2d8] sm:$0xff]
    %v429 = vld [vmem:[%s1 + $0x2e0] sm:$0xff]
    %v430 = vld [vmem:[%s1 + $0x2e8] sm:$0xff]
    %v431 = vld [vmem:[%s1 + $0x2f0] sm:$0xff]
    %v432 = vld [vmem:[%s1 + $0x2f8] sm:$0xff]
    %v433 = vld [vmem:[%s1 + $0x300] sm:$0xff]
    %v434 = vld [vmem:[%s1 + $0x308] sm:$0xff]
    %v435 = vld [vmem:[%s1 + $0x310] sm:$0xff]
    %v436 = vld [vmem:[%s1 + $0x318] sm:$0xff]
    %v437 = vld [vmem:[%s1 + $0x320] sm:$0xff]
    %v438 = vld [vmem:[%s1 + $0x328] sm:$0xff]
    %v439 = vld [vmem:[%s1 + $0x330] sm:$0xff]
    %v440 = vld [vmem:[%s1 + $0x338] sm:$0xff]
    %v441 = vld [vmem:[%s1 + $0x340] sm:$0xff]
    %v442 = vld [vmem:[%s1 + $0x348] sm:$0xff]
    %v443 = vld [vmem:[%s1 + $0x350] sm:$0xff]
    %v444 = vld [vmem:[%s1 + $0x358] sm:$0xff]
    %v445 = vld [vmem:[%s1 + $0x360] sm:$0xff]
    %v446 = vld [vmem:[%s1 + $0x368] sm:$0xff]
    %v447 = vld [vmem:[%s1 + $0x370] sm:$0xff]
    %v448 = vld [vmem:[%s1 + $0x378] sm:$0xff]
    %v449 = vld [vmem:[%s1 + $0x380] sm:$0xff]
    %v450 = vld [vmem:[%s1 + $0x388] sm:$0xff]
    %v451 = vld [vmem:[%s1 + $0x390] sm:$0xff]
    %v452 = vld [vmem:[%s1 + $0x398] sm:$0xff]
    %v453 = vld [vmem:[%s1 + $0x3a0] sm:$0xff]
    %v454 = vld [vmem:[%s1 + $0x3a8] sm:$0xff]
    %v455 = vld [vmem:[%s1 + $0x3b0] sm:$0xff]
    %v456 = vld [vmem:[%s1 + $0x3b8] sm:$0xff]
    %v457 = vld [vmem:[%s1 + $0x3c0] sm:$0xff]
    %v458 = vld [vmem:[%s1 + $0x3c8] sm:$0xff]
    %v459 = vld [vmem:[%s1 + $0x3d0] sm:$0xff]
    %v460 = vld [vmem:[%s1 + $0x3d8] sm:$0xff]
    %v461 = vld [vmem:[%s1 + $0x3e0] sm:$0xff]
    %v462 = vld [vmem:[%s1 + $0x3e8] sm:$0xff]
    %v463 = vld [vmem:[%s1 + $0x3f0] sm:$0xff]
    %v464 = vld [vmem:[%s1 + $0x3f8] sm:$0xff]
    %v465 = vld [vmem:[%s1 + $0x400] sm:$0xff]
    %v466 = vld [vmem:[%s1 + $0x408] sm:$0xff]
    %v467 = vld [vmem:[%s1 + $0x410] sm:$0xff]
    %v468 = vld [vmem:[%s1 + $0x418] sm:$0xff]
    %v469 = vld [vmem:[%s1 + $0x420] sm:$0xff]
    %v470 = vld [vmem:[%s1 + $0x428] sm:$0xff]
    %v471 = vld [vmem:[%s1 + $0x430] sm:$0xff]
    %v472 = vld [vmem:[%s1 + $0x438] sm:$0xff]
    %v473 = vld [vmem:[%s1 + $0x440] sm:$0xff]
    %v474 = vld [vmem:[%s1 + $0x448] sm:$0xff]
    %v475 = vld [vmem:[%s1 + $0x450] sm:$0xff]
    %v476 = vld [vmem:[%s1 + $0x458] sm:$0xff]
    %v477 = vld [vmem:[%s1 + $0x460] sm:$0xff]
    %v478 = vld [vmem:[%s1 + $0x468] sm:$0xff]
    %v479 = vld [vmem:[%s1 + $0x470] sm:$0xff]
    %v480 = vld [vmem:[%s1 + $0x478] sm:$0xff]
    %v481 = vld [vmem:[%s1 + $0x480] sm:$0xff]
    %v482 = vld [vmem:[%s1 + $0x488] sm:$0xff]
    %v483 = vld [vmem:[%s1 + $0x490] sm:$0xff]
    %v484 = vld [vmem:[%s1 + $0x498] sm:$0xff]
    %v485 = vld [vmem:[%s1 + $0x4a0] sm:$0xff]
    %v486 = vld [vmem:[%s1 + $0x4a8] sm:$0xff]
    %v487 = vld [vmem:[%s1 + $0x4b0] sm:$0xff]
    %v488 = vld [vmem:[%s1 + $0x4b8] sm:$0xff]
    %v489 = vld [vmem:[%s1 + $0x4c0] sm:$0xff]
    %v490 = vld [vmem:[%s1 + $0x4c8] sm:$0xff]
    %v491 = vld [vmem:[%s1 + $0x4d0] sm:$0xff]
    %v492 = vld [vmem:[%s1 + $0x4d8] sm:$0xff]
    %v493 = vld [vmem:[%s1 + $0x4e0] sm:$0xff]
    %v494 = vld [vmem:[%s1 + $0x4e8] sm:$0xff]
    %v495 = vld [vmem:[%s1 + $0x4f0] sm:$0xff]
    %v496 = vld [vmem:[%s1 + $0x4f8] sm:$0xff]
    %v497 = vlaneseq
    %v498 = vshrl.u32 %v497, 7
    %v499 = vsub.s32 1, %v498
    %v500 = vrot.slane %v32, %v499
    %v501 = vlaneseq
    %v502 = vshrl.u32 %v501, 7
    %v503 = vsub.s32 1, %v502
    %v504 = vrot.slane %v33, %v503
    %505 = vmatprep.subr.mxu0 %v368
    %506 = vmatpush1.msra.mxu0 %v367
    %507 = vmatprep.subr.mxu0 %v366
    %508 = vmatpush1.msra.mxu0 %v365
    %509 = vmatprep.subr.mxu0 %v364
    %510 = vmatpush1.msra.mxu0 %v363
    %511 = vmatprep.subr.mxu0 %v362
    %512 = vmatpush1.msra.mxu0 %v361
    %513 = vmatprep.subr.mxu0 %v360
    %514 = vmatpush1.msra.mxu0 %v359
    %515 = vmatprep.subr.mxu0 %v358
    %516 = vmatpush1.msra.mxu0 %v357
    %517 = vmatprep.subr.mxu0 %v356
    %518 = vmatpush1.msra.mxu0 %v355
    %519 = vmatprep.subr.mxu0 %v354
    %520 = vmatpush1.msra.mxu0 %v353
    %521 = vmatprep.subr.mxu0 %v352
    %522 = vmatpush1.msra.mxu0 %v351
    %523 = vmatprep.subr.mxu0 %v350
    %524 = vmatpush1.msra.mxu0 %v349
    %525 = vmatprep.subr.mxu0 %v348
    %526 = vmatpush1.msra.mxu0 %v347
    %527 = vmatprep.subr.mxu0 %v346
    %528 = vmatpush1.msra.mxu0 %v345
    %529 = vmatprep.subr.mxu0 %v344
    %530 = vmatpush1.msra.mxu0 %v343
    %531 = vmatprep.subr.mxu0 %v342
    %532 = vmatpush1.msra.mxu0 %v341
    %533 = vmatprep.subr.mxu0 %v340
    %534 = vmatpush1.msra.mxu0 %v339
    %535 = vmatprep.subr.mxu0 %v338
    %536 = vmatpush1.msra.mxu0 %v337
    %537 = vmatprep.subr.mxu0 %v400
    %538 = vmatpush2.msra.mxu0 %v399
    %539 = vmatprep.subr.mxu0 %v398
    %540 = vmatpush2.msra.mxu0 %v397
    %541 = vmatprep.subr.mxu0 %v396
    %542 = vmatpush2.msra.mxu0 %v395
    %543 = vmatprep.subr.mxu0 %v394
    %544 = vmatpush2.msra.mxu0 %v393
    %545 = vmatprep.subr.mxu0 %v392
    %546 = vmatpush2.msra.mxu0 %v391
    %547 = vmatprep.subr.mxu0 %v390
    %548 = vmatpush2.msra.mxu0 %v389
    %549 = vmatprep.subr.mxu0 %v388
    %550 = vmatpush2.msra.mxu0 %v387
    %551 = vmatprep.subr.mxu0 %v386
    %552 = vmatpush2.msra.mxu0 %v385
    %553 = vmatprep.subr.mxu0 %v384
    %554 = vmatpush2.msra.mxu0 %v383
    %555 = vmatprep.subr.mxu0 %v382
    %556 = vmatpush2.msra.mxu0 %v381
    %557 = vmatprep.subr.mxu0 %v380
    %558 = vmatpush2.msra.mxu0 %v379
    %559 = vmatprep.subr.mxu0 %v378
    %560 = vmatpush2.msra.mxu0 %v377
    %561 = vmatprep.subr.mxu0 %v376
    %562 = vmatpush2.msra.mxu0 %v375
    %563 = vmatprep.subr.mxu0 %v374
    %564 = vmatpush2.msra.mxu0 %v373
    %565 = vmatprep.subr.mxu0 %v372
    %566 = vmatpush2.msra.mxu0 %v371
    %567 = vmatprep.subr.mxu0 %v370
    %568 = vmatpush2.msra.mxu0 %v369
    %569 = vmatprep.mubr.f32.mxu0 %v318
    %570 = vmatmul.mubr.f32.gmra.mxu0 %v317
    %v571 = vpop.f32.mrf.mxu0
    %v572 = vadd.f32 %v500, %v571
    %v573 = vpop.f32.mrf.mxu0
    %v574 = vadd.f32 %v504, %v573
    %575 = vmatprep.mubr.f32.mxu0 %v323
    %576 = vmatmul.mubr.f32.gmra.mxu0 %v322
    %v577 = vpop.f32.mrf.mxu0
    %v578 = vadd.f32 %v500, %v577
    %v579 = vpop.f32.mrf.mxu0
    %v580 = vadd.f32 %v504, %v579
    %581 = vmatprep.mubr.f32.mxu0 %v328
    %582 = vmatmul.mubr.f32.gmra.mxu0 %v327
    %v583 = vpop.f32.mrf.mxu0
    %v584 = vadd.f32 %v500, %v583
    %v585 = vpop.f32.mrf.mxu0
    %v586 = vadd.f32 %v504, %v585
    %587 = vmatprep.mubr.f32.mxu0 %v333
    %588 = vmatmul.mubr.f32.gmra.mxu0 %v332
    %v589 = vpop.f32.mrf.mxu0
    %v590 = vadd.f32 %v500, %v589
    %v591 = vpop.f32.mrf.mxu0
    %v592 = vadd.f32 %v504, %v591
    %593 = vdwg.mxu0
    %594 = vmatprep.subr.mxu0 %v432
    %595 = vmatpush1.msra.mxu0 %v431
    %596 = vmatprep.subr.mxu0 %v430
    %597 = vmatpush1.msra.mxu0 %v429
    %598 = vmatprep.subr.mxu0 %v428
    %599 = vmatpush1.msra.mxu0 %v427
    %600 = vmatprep.subr.mxu0 %v426
    %601 = vmatpush1.msra.mxu0 %v425
    %602 = vmatprep.subr.mxu0 %v424
    %603 = vmatpush1.msra.mxu0 %v423
    %604 = vmatprep.subr.mxu0 %v422
    %605 = vmatpush1.msra.mxu0 %v421
    %606 = vmatprep.subr.mxu0 %v420
    %607 = vmatpush1.msra.mxu0 %v419
    %608 = vmatprep.subr.mxu0 %v418
    %609 = vmatpush1.msra.mxu0 %v417
    %610 = vmatprep.subr.mxu0 %v416
    %611 = vmatpush1.msra.mxu0 %v415
    %612 = vmatprep.subr.mxu0 %v414
    %613 = vmatpush1.msra.mxu0 %v413
    %614 = vmatprep.subr.mxu0 %v412
    %615 = vmatpush1.msra.mxu0 %v411
    %616 = vmatprep.subr.mxu0 %v410
    %617 = vmatpush1.msra.mxu0 %v409
    %618 = vmatprep.subr.mxu0 %v408
    %619 = vmatpush1.msra.mxu0 %v407
    %620 = vmatprep.subr.mxu0 %v406
    %621 = vmatpush1.msra.mxu0 %v405
    %622 = vmatprep.subr.mxu0 %v404
    %623 = vmatpush1.msra.mxu0 %v403
    %624 = vmatprep.subr.mxu0 %v402
    %625 = vmatpush1.msra.mxu0 %v401
    %626 = vmatprep.subr.mxu0 %v464
    %627 = vmatpush2.msra.mxu0 %v463
    %628 = vmatprep.subr.mxu0 %v462
    %629 = vmatpush2.msra.mxu0 %v461
    %630 = vmatprep.subr.mxu0 %v460
    %631 = vmatpush2.msra.mxu0 %v459
    %632 = vmatprep.subr.mxu0 %v458
    %633 = vmatpush2.msra.mxu0 %v457
    %634 = vmatprep.subr.mxu0 %v456
    %635 = vmatpush2.msra.mxu0 %v455
    %636 = vmatprep.subr.mxu0 %v454
    %637 = vmatpush2.msra.mxu0 %v453
    %638 = vmatprep.subr.mxu0 %v452
    %639 = vmatpush2.msra.mxu0 %v451
    %640 = vmatprep.subr.mxu0 %v450
    %641 = vmatpush2.msra.mxu0 %v449
    %642 = vmatprep.subr.mxu0 %v448
    %643 = vmatpush2.msra.mxu0 %v447
    %644 = vmatprep.subr.mxu0 %v446
    %645 = vmatpush2.msra.mxu0 %v445
    %646 = vmatprep.subr.mxu0 %v444
    %647 = vmatpush2.msra.mxu0 %v443
    %648 = vmatprep.subr.mxu0 %v442
    %649 = vmatpush2.msra.mxu0 %v441
    %650 = vmatprep.subr.mxu0 %v440
    %651 = vmatpush2.msra.mxu0 %v439
    %652 = vmatprep.subr.mxu0 %v438
    %653 = vmatpush2.msra.mxu0 %v437
    %654 = vmatprep.subr.mxu0 %v436
    %655 = vmatpush2.msra.mxu0 %v435
    %656 = vmatprep.subr.mxu0 %v434
    %657 = vmatpush2.msra.mxu0 %v433
    %658 = vmatprep.mubr.f32.mxu0 %v320
    %659 = vmatmul.mubr.f32.gmra.mxu0 %v319
    %v660 = vpop.f32.mrf.mxu0
    %v661 = vadd.f32 %v572, %v660
    %v662 = vpop.f32.mrf.mxu0
    %v663 = vadd.f32 %v574, %v662
    %664 = vmatprep.mubr.f32.mxu0 %v325
    %665 = vmatmul.mubr.f32.gmra.mxu0 %v324
    %v666 = vpop.f32.mrf.mxu0
    %v667 = vadd.f32 %v578, %v666
    %v668 = vpop.f32.mrf.mxu0
    %v669 = vadd.f32 %v580, %v668
    %670 = vmatprep.mubr.f32.mxu0 %v330
    %671 = vmatmul.mubr.f32.gmra.mxu0 %v329
    %v672 = vpop.f32.mrf.mxu0
    %v673 = vadd.f32 %v584, %v672
    %v674 = vpop.f32.mrf.mxu0
    %v675 = vadd.f32 %v586, %v674
    %676 = vmatprep.mubr.f32.mxu0 %v335
    %677 = vmatmul.mubr.f32.gmra.mxu0 %v334
    %v678 = vpop.f32.mrf.mxu0
    %v679 = vadd.f32 %v590, %v678
    %v680 = vpop.f32.mrf.mxu0
    %v681 = vadd.f32 %v592, %v680
    %682 = vdwg.mxu0
    %683 = vmatprep.subr.mxu0 %v496
    %684 = vmatpush1.msra.mxu0 %v495
    %685 = vmatprep.subr.mxu0 %v494
    %686 = vmatpush1.msra.mxu0 %v493
    %687 = vmatprep.subr.mxu0 %v492
    %688 = vmatpush1.msra.mxu0 %v491
    %689 = vmatprep.subr.mxu0 %v490
    %690 = vmatpush1.msra.mxu0 %v489
    %691 = vmatprep.subr.mxu0 %v488
    %692 = vmatpush1.msra.mxu0 %v487
    %693 = vmatprep.subr.mxu0 %v486
    %694 = vmatpush1.msra.mxu0 %v485
    %695 = vmatprep.subr.mxu0 %v484
    %696 = vmatpush1.msra.mxu0 %v483
    %697 = vmatprep.subr.mxu0 %v482
    %698 = vmatpush1.msra.mxu0 %v481
    %699 = vmatprep.subr.mxu0 %v480
    %700 = vmatpush1.msra.mxu0 %v479
    %701 = vmatprep.subr.mxu0 %v478
    %702 = vmatpush1.msra.mxu0 %v477
    %703 = vmatprep.subr.mxu0 %v476
    %704 = vmatpush1.msra.mxu0 %v475
    %705 = vmatprep.subr.mxu0 %v474
    %706 = vmatpush1.msra.mxu0 %v473
    %707 = vmatprep.subr.mxu0 %v472
    %708 = vmatpush1.msra.mxu0 %v471
    %709 = vmatprep.subr.mxu0 %v470
    %710 = vmatpush1.msra.mxu0 %v469
    %711 = vmatprep.subr.mxu0 %v468
    %712 = vmatpush1.msra.mxu0 %v467
    %713 = vmatprep.subr.mxu0 %v466
    %714 = vmatpush1.msra.mxu0 %v465
    %715 = vmatprep.subr.mxu0 0.0
    %716 = vmatpush2.msra.mxu0 0.0
    %717 = vmatprep.subr.mxu0 0.0
    %718 = vmatpush2.msra.mxu0 0.0
    %719 = vmatprep.subr.mxu0 0.0
    %720 = vmatpush2.msra.mxu0 0.0
    %721 = vmatprep.subr.mxu0 0.0
    %722 = vmatpush2.msra.mxu0 0.0
    %723 = vmatprep.subr.mxu0 0.0
    %724 = vmatpush2.msra.mxu0 0.0
    %725 = vmatprep.subr.mxu0 0.0
    %726 = vmatpush2.msra.mxu0 0.0
    %727 = vmatprep.subr.mxu0 0.0
    %728 = vmatpush2.msra.mxu0 0.0
    %729 = vmatprep.subr.mxu0 0.0
    %730 = vmatpush2.msra.mxu0 0.0
    %731 = vmatprep.subr.mxu0 0.0
    %732 = vmatpush2.msra.mxu0 0.0
    %733 = vmatprep.subr.mxu0 0.0
    %734 = vmatpush2.msra.mxu0 0.0
    %735 = vmatprep.subr.mxu0 0.0
    %736 = vmatpush2.msra.mxu0 0.0
    %737 = vmatprep.subr.mxu0 0.0
    %738 = vmatpush2.msra.mxu0 0.0
    %739 = vmatprep.subr.mxu0 0.0
    %740 = vmatpush2.msra.mxu0 0.0
    %741 = vmatprep.subr.mxu0 0.0
    %742 = vmatpush2.msra.mxu0 0.0
    %743 = vmatprep.subr.mxu0 0.0
    %744 = vmatpush2.msra.mxu0 0.0
    %745 = vmatprep.subr.mxu0 0.0
    %746 = vmatpush2.msra.mxu0 0.0
    %747 = vmatprep.mubr.f32.mxu0 0.0
    %748 = vmatmul.mubr.f32.gmra.mxu0 %v321
    %v749 = vpop.f32.mrf.mxu0
    %v750 = vadd.f32 %v661, %v749
    %v751 = vpop.f32.mrf.mxu0
    %v752 = vadd.f32 %v663, %v751
    %753 = vmatprep.mubr.f32.mxu0 0.0
    %754 = vmatmul.mubr.f32.gmra.mxu0 %v326
    %v755 = vpop.f32.mrf.mxu0
    %v756 = vadd.f32 %v667, %v755
    %v757 = vpop.f32.mrf.mxu0
    %v758 = vadd.f32 %v669, %v757
    %759 = vmatprep.mubr.f32.mxu0 0.0
    %760 = vmatmul.mubr.f32.gmra.mxu0 %v331
    %v761 = vpop.f32.mrf.mxu0
    %v762 = vadd.f32 %v673, %v761
    %v763 = vpop.f32.mrf.mxu0
    %v764 = vadd.f32 %v675, %v763
    %765 = vmatprep.mubr.f32.mxu0 0.0
    %766 = vmatmul.mubr.f32.gmra.mxu0 %v336
    %v767 = vpop.f32.mrf.mxu0
    %v768 = vadd.f32 %v679, %v767
    %v769 = vpop.f32.mrf.mxu0
    %v770 = vadd.f32 %v681, %v769
    %771 = vdwg.mxu0
    %v772 = vmax.f32 %v750, 0.0
    %v773 = vmax.f32 %v752, 0.0
    %v774 = vmax.f32 %v756, 0.0
    %v775 = vmax.f32 %v758, 0.0
    %v776 = vmax.f32 %v762, 0.0
    %v777 = vmax.f32 %v764, 0.0
    %v778 = vmax.f32 %v768, 0.0
    %v779 = vmax.f32 %v770, 0.0
    %v780 = vld [vmem:[%s1 + $0x560] sm:$0xff]
    %v781 = vld [vmem:[%s1 + $0x568] sm:$0xff]
    %v782 = vld [vmem:[%s1 + $0x570] sm:$0xff]
    %v783 = vld [vmem:[%s1 + $0x578] sm:$0xff]
    %v784 = vld [vmem:[%s1 + $0x580] sm:$0xff]
    %v785 = vld [vmem:[%s1 + $0x588] sm:$0xff]
    %v786 = vld [vmem:[%s1 + $0x590] sm:$0xff]
    %v787 = vld [vmem:[%s1 + $0x598] sm:$0xff]
    %v788 = vmul.f32 %v772, %v780
    %v789 = vmul.f32 %v773, %v781
    %v790 = vmul.f32 %v774, %v782
    %v791 = vmul.f32 %v775, %v783
    %v792 = vmul.f32 %v776, %v784
    %v793 = vmul.f32 %v777, %v785
    %v794 = vmul.f32 %v778, %v786
    %v795 = vmul.f32 %v779, %v787
    %v796 = vmax.f32 %v788, %v790
    %v797 = vrot.slane %v796, 4
    %v798 = vmax.f32 %v796, %v797
    %v799 = vrot.slane %v798, 2
    %v800 = vmax.f32 %v798, %v799
    %v801 = vrot.slane %v800, 1
    %v802 = vmax.f32 %v800, %v801
    %v803 = vsel %vm58, %v789, -inf
    %v804 = vsel %vm58, %v791, -inf
    %v805 = vmax.f32 %v803, %v804
    %v806 = vrot.slane %v805, 4
    %v807 = vmax.f32 %v805, %v806
    %v808 = vrot.slane %v807, 2
    %v809 = vmax.f32 %v807, %v808
    %v810 = vrot.slane %v809, 1
    %v811 = vmax.f32 %v809, %v810
    %v812 = vmax.f32 %v792, %v794
    %v813 = vrot.slane %v812, 4
    %v814 = vmax.f32 %v812, %v813
    %v815 = vrot.slane %v814, 2
    %v816 = vmax.f32 %v814, %v815
    %v817 = vrot.slane %v816, 1
    %v818 = vmax.f32 %v816, %v817
    %v819 = vsel %vm58, %v793, -inf
    %v820 = vsel %vm58, %v795, -inf
    %v821 = vmax.f32 %v819, %v820
    %v822 = vrot.slane %v821, 4
    %v823 = vmax.f32 %v821, %v822
    %v824 = vrot.slane %v823, 2
    %v825 = vmax.f32 %v823, %v824
    %v826 = vrot.slane %v825, 1
    %v827 = vmax.f32 %v825, %v826
    %vm832 = vcmask 1041409
    %v833 = vsel %vm832, %v818, %v802
    %v834 = vsel %vm832, %v827, %v811
    %vm837 = vcmask 1041408
    %v838 = vsel %vm837, %v833, 0.0
    %vm839 = vcmask 254976
    %v840 = vsel %vm839, %v834, 0.0
    %v841 = vadd.f32 %v838, %v840
    %842 = vadd.xlane.f32.xlu0 %v841
    %v843 = vpop.xlane.xlu0 %842
    %v844 = vrcp.pop 160.0
    %v845 = vmul.f32 %v843, %v844
    %v847 = vrot.slane %v845, 1
    %v850 = vsub.f32 %v802, %v845
    %v851 = vsub.f32 %v811, %v845
    %v852 = vsub.f32 %v818, %v847
    %v853 = vsub.f32 %v827, %v847
    %v854 = vmul.f32 %v850, %v850
    %v855 = vmul.f32 %v851, %v851
    %v856 = vmul.f32 %v852, %v852
    %v857 = vmul.f32 %v853, %v853
    %v862 = vrot.slane %v856, 7
    %v863 = vsel %vm832, %v862, %v854
    %v864 = vrot.slane %v857, 7
    %v865 = vsel %vm832, %v864, %v855
    %v868 = vsel %vm837, %v863, 0.0
    %v869 = vsel %vm839, %v865, 0.0
    %v870 = vadd.f32 %v868, %v869
    %871 = vadd.xlane.f32.xlu0 %v870
    %v872 = vpop.xlane.xlu0 %871
    %v873 = vmul.f32 %v872, %v844
    %v874 = vadd.f32 %v873, 1e-05
    %v875 = vrsqrt.pop %v874
    %v877 = vrot.slane %v875, 1
    %v880 = vmul.f32 %v850, %v875
    %v881 = vmul.f32 %v851, %v875
    %v882 = vmul.f32 %v852, %v877
    %v883 = vmul.f32 %v853, %v877
    %v884 = vlaneseq
    %v885 = vshrl.u32 %v884, 7
    %v886 = vsub.s32 2, %v885
    %v887 = vrot.slane %v32, %v886
    %v888 = vlaneseq
    %v889 = vshrl.u32 %v888, 7
    %v890 = vsub.s32 2, %v889
    %v891 = vrot.slane %v33, %v890
    %v892 = vmul.f32 %v880, %v887
    %v893 = vmul.f32 %v881, %v891
    %v894 = vmul.f32 %v882, %v887
    %v895 = vmul.f32 %v883, %v891
    %v896 = vlaneseq
    %v897 = vshrl.u32 %v896, 7
    %v898 = vsub.s32 3, %v897
    %v899 = vrot.slane %v32, %v898
    %v900 = vlaneseq
    %v901 = vshrl.u32 %v900, 7
    %v902 = vsub.s32 3, %v901
    %v903 = vrot.slane %v33, %v902
    %v904 = vadd.f32 %v892, %v899
    %v905 = vadd.f32 %v893, %v903
    %v906 = vadd.f32 %v894, %v899
    %v907 = vadd.f32 %v895, %v903
    %v912 = vcombine.low %v904, %v905
    %v914 = vunpack.c.l.s4 1983009808
    %v915 = vunpack.c.0.s8 %v914
    %v916 = vlaneseq
    %v917 = vshrl.u32 %v916, 7
    %v918 = vsub.s32 %v915, %v917
    %v919 = vrot.slane %v912, %v918
    %v920 = vcombine.low %v906, %v907
    %v922 = vunpack.c.l.s4 1983009808
    %v923 = vunpack.c.0.s8 %v922
    %v924 = vlaneseq
    %v925 = vshrl.u32 %v924, 7
    %v926 = vsub.s32 %v923, %v925
    %v927 = vrot.slane %v920, %v926
    %vm928 = vcmask 1044484
    %v929 = vsel %vm928, %v919, %v919
    %vm930 = vcmask 1046534
    %v931 = vsel %vm930, %v919, %v929
    %v932 = vrot.slane %v927, 7
    %v933 = vsel %vm832, %v932, %v931
    %vm934 = vcmask 1043459
    %v935 = vsel %vm934, %v932, %v933
    %vm936 = vcmask 1045509
    %v937 = vsel %vm936, %v932, %v935
    %vm938 = vcmask 1047559
    %v939 = vsel %vm938, %v932, %v937
    %vm941 = vcmask 257026
    %vm942 = vmor %vm941, %vm837
    %943 = vst.msk [vmem:[#allocation3] sm:$0xf] %vm942, %v939
    // Predicated region
    $region10: #{new_encoder_pallas.1} parent=1 // pred_check
      _
    $region11: #{new_encoder_pallas.1} parent=1 // pred_check_branch
      %945 = sbr.rel (0) target = $region13
    $region12: #{new_encoder_pallas.1} parent=1 // pred_region
      %s947 = ssub.s32 64, 64
      %948 = vsyncadd [#allocation4], %s947
      %s950 = sshll.u32 [#allocation3], 4
      %s951 = int_to_ptr.vmem [resolvable:$true] %s950
      %953 = dma.vmem_to_hbm [thread:$0]  %s951, 64, %s2, [#allocation4]
    $region13: #{new_encoder_pallas.1} parent=1 // pred_fallthru
      _
    // Predicated region
    $region14: #{new_encoder_pallas.1} parent=1 // pred_check
      _
    $region15: #{new_encoder_pallas.1} parent=1 // pred_check_branch
      %955 = sbr.rel (0) target = $region17
    $region16: #{new_encoder_pallas.1} parent=1 // pred_region
      %956 = dma.done [#allocation4], 64
    $region17: #{new_encoder_pallas.1} parent=1 // pred_fallthru
      _
    %957 = vsyncpa [#allocation4], 1

</llo_original>
